<compile_context>
chip_gen: v7x
topology: tpu7x:2x2x1
jax: 0.10.0
libtpu: 0.0.40
codegen_flags: <defaults>
</compile_context>

<pallas_src>
import functools

import jax
import jax.numpy as jnp
from jax.experimental import pallas as pl
from jax.experimental.pallas import tpu as pltpu


# ---------------------------------------------------------------------------
# Fused Pallas kernel: all branches, grid = (branch, batch, L-tile)
# ---------------------------------------------------------------------------
def _fused_dyn_conv1d_kernel(att_ref, w_ref, b_ref, xc_ref, o_ref, *,
                             num_experts, batch):
    # att_ref: (R*B*K,) f32 in SMEM      per-(branch,batch) expert attention
    # w_ref:   (1, K, Cout, Kc) f32      expert weight bank of current branch
    # b_ref:   (1, 1, Cout, 1) f32       pre-aggregated bias for (branch,batch)
    # xc_ref:  (1, 1, Kc, TL) bf16       im2col input tile, Kc = ksz*Cin
    # o_ref:   (1, Cout, TL)             output channel-slab / spatial tile
    r = pl.program_id(0)
    b = pl.program_id(1)
    base = (r * batch + b) * num_experts

    # Expert aggregation hoisted out of any tap loop: K scalar reads from SMEM,
    # K vreg-wide FMAs over the whole flattened (Cout, ksz*Cin) bank (f32).
    w_agg = att_ref[base] * w_ref[0, 0]
    for k in range(1, num_experts):
        w_agg = w_agg + att_ref[base + k] * w_ref[0, k]

    # Single MXU matmul folds all kernel taps: (Cout, ksz*Cin) @ (ksz*Cin, TL),
    # bf16 operands with f32 accumulation.
    acc = jnp.dot(w_agg.astype(jnp.bfloat16), xc_ref[0, 0],
                  preferred_element_type=jnp.float32)
    o_ref[0] = (acc + b_ref[0, 0]).astype(o_ref.dtype)


# ---------------------------------------------------------------------------
# Wrapper helpers
# ---------------------------------------------------------------------------
def _weight_bank(weight):
    # (K, Cout, Cin, ksz) -> (K, Cout, ksz*Cin); row order matches the im2col
    # layout x_col[t*Cin + c, l] = x_pad[c, l + t*dilation].
    K, Cout, Cin, ksz = weight.shape
    return jnp.transpose(weight, (0, 1, 3, 2)).reshape(K, Cout, ksz * Cin)


def _im2col(x, ksz, dilation):
    # x: (B, Cin, L) -> (B, ksz*Cin, L)   ("same" padding, stride 1)
    B, Cin, L = x.shape
    pad = int((ksz - 1) / 2 * dilation)          # matches monai same_padding
    x_pad = jnp.pad(x, ((0, 0), (0, 0), (pad, pad)))
    cols = [x_pad[:, :, t * dilation: t * dilation + L] for t in range(ksz)]
    return jnp.concatenate(cols, axis=1)


def _pick_spatial_tile(L, max_tile=1024):
    if L <= max_tile:
        return L
    for t in (1024, 512, 256, 128):
        if L % t == 0:
            return t
    return L  # TODO(synk): very long non-128-multiple L falls back to one tile.


def fused_aspp_dyn_conv1d(att, w_bank, b_agg, x_col, *, out_dtype):
    """Fused multi-branch dynamic dilated conv1d.

    att:    (R, B, K)        f32  softmax attention per (branch, batch)
    w_bank: (R, K, Cout, Kc) f32  expert weight banks, Kc = ksz*Cin
    b_agg:  (R, B, Cout, 1)  f32  pre-aggregated bias
    x_col:  (R, B, Kc, L)    bf16 per-branch im2col input (dilation baked in)
    returns (B, R*Cout, L)
    """
    R, B, K = att.shape
    Cout, Kc = w_bank.shape[2], w_bank.shape[3]
    L = x_col.shape[-1]
    tl = _pick_spatial_tile(L)
    nl = L // tl

    kernel = functools.partial(_fused_dyn_conv1d_kernel,
                               num_experts=K, batch=B)
    return pl.pallas_call(
        kernel,
        out_shape=jax.ShapeDtypeStruct((B, R * Cout, L), out_dtype),
        grid_spec=pltpu.PrefetchScalarGridSpec(
            num_scalar_prefetch=0,
            grid=(R, B, nl),
            in_specs=[
                # attention scalars, flattened 1-D in SMEM
                pl.BlockSpec(memory_space=pltpu.MemorySpace.SMEM),
                # expert weight bank: block index only depends on the branch
                # axis -> stays resident across batch / L-tile steps
                pl.BlockSpec((1, K, Cout, Kc), lambda r, b, l: (r, 0, 0, 0)),
                pl.BlockSpec((1, 1, Cout, 1), lambda r, b, l: (r, b, 0, 0)),
                pl.BlockSpec((1, 1, Kc, tl), lambda r, b, l: (r, b, 0, l)),
            ],
            out_specs=pl.BlockSpec((1, Cout, tl), lambda r, b, l: (b, r, l)),
        ),
        compiler_params=pltpu.CompilerParams(
            dimension_semantics=("parallel", "parallel", "parallel")),
    )(att.reshape(-1), w_bank, b_agg, x_col)


# ---------------------------------------------------------------------------
# attention1d (standard Dynamic Convolution gating MLP) -- tiny, plain JAX glue
# ---------------------------------------------------------------------------
def attention1d_forward(reference3d, fc1_w, fc2_w, fc2_b, temperature):
    # reference3d: (B, ref_dim, 1)
    pooled = jnp.mean(reference3d, axis=-1)                 # AdaptiveAvgPool1d(1)
    h = jnp.maximum(pooled @ fc1_w.T, 0.0)                  # 1x1 conv (no bias) + relu
    logits = h @ fc2_w.T + fc2_b                            # 1x1 conv (with bias)
    return jax.nn.softmax(logits / temperature, axis=1)     # (B, K)


# ---------------------------------------------------------------------------
# ASPP_DynamicConv1d_Refer
# ---------------------------------------------------------------------------
class ASPPDynamicConv1dReferPallas:
    def __init__(self, key, reference_dim, dilate_rate, K, kernel_size,
                 in_planes, out_planes, ratio=0.25, temperature=34.0):
        if isinstance(kernel_size, int):
            kernel_size = [kernel_size] * len(dilate_rate)
        for ksz, dil in zip(kernel_size, dilate_rate):
            if ((ksz - 1) * dil) % 2 == 1:
                raise NotImplementedError(
                    f"Same padding not available for kernel_size={ksz}, "
                    f"dilation={dil}.")
        hidden = K if reference_dim == 3 else int(reference_dim * ratio) + 1
        self.temperature = float(temperature)
        self.in_planes = in_planes
        self.out_planes = out_planes
        self.K = K
        self.branches = []
        for ksz, dil in zip(kernel_size, dilate_rate):
            key, k1, k2, k3 = jax.random.split(key, 4)
            # kaiming-uniform-like deterministic init for the expert weight bank
            fan_in = in_planes * ksz
            bound = (6.0 / fan_in) ** 0.5
            weight = jax.random.uniform(
                k1, (K, out_planes, in_planes, ksz), jnp.float32, -bound, bound)
            bias = jnp.zeros((K, out_planes), jnp.float32)
            fc1_w = jax.random.uniform(
                k2, (hidden, reference_dim), jnp.float32, -1.0, 1.0) / (reference_dim ** 0.5)
            fc2_w = jax.random.uniform(
                k3, (K, hidden), jnp.float32, -1.0, 1.0) / (hidden ** 0.5)
            fc2_b = jnp.zeros((K,), jnp.float32)
            self.branches.append(dict(
                weight=weight, bias=bias, fc1_w=fc1_w, fc2_w=fc2_w, fc2_b=fc2_b,
                ksz=ksz, dilation=dil))

    def _run_branch_group(self, branches, atts, x_bf16, out_dtype):
        att = jnp.stack(atts, axis=0)                                  # (R,B,K)
        w_bank = jnp.stack([_weight_bank(br["weight"]) for br in branches])
        bias = jnp.stack([br["bias"] for br in branches])              # (R,K,Cout)
        b_agg = jnp.einsum("rbk,rkc->rbc", att, bias)[..., None]       # (R,B,Cout,1)
        x_col = jnp.stack([_im2col(x_bf16, br["ksz"], br["dilation"])
                           for br in branches])                        # (R,B,Kc,L)
        return fused_aspp_dyn_conv1d(att, w_bank, b_agg, x_col,
                                     out_dtype=out_dtype)

    def __call__(self, reference, x):
        # reference: (B, reference_dim); x: (B, in_planes, L)
        reference3d = reference[:, :, None]          # .unsqueeze(-1)
        atts = [attention1d_forward(reference3d, br["fc1_w"], br["fc2_w"],
                                    br["fc2_b"], self.temperature)
                for br in self.branches]
        x_bf16 = x.astype(jnp.bfloat16)   # bf16 operands, f32 MXU accumulation
        same_ksz = len({br["ksz"] for br in self.branches}) == 1
        if same_ksz and self.out_planes % 8 == 0:
            # single fused pallas_call, each branch writes its channel slab
            return self._run_branch_group(self.branches, atts, x_bf16, x.dtype)
        # Fallback (mixed kernel sizes or sublane-unaligned Cout):
        # one pallas_call per branch, concatenated along channels.
        outs = [self._run_branch_group([br], [a], x_bf16, x.dtype)
                for br, a in zip(self.branches, atts)]
        return jnp.concatenate(outs, axis=1)


# ---------------------------------------------------------------------------
# Pure-JAX reference for one branch (replicates the kernel's bf16 operand
# rounding with f32 accumulation) -- used as a correctness check
# ---------------------------------------------------------------------------
def _reference_branch(att, weight, bias, x, dilation):
    B = x.shape[0]
    K, Cout, Cin, ksz = weight.shape
    w_agg = jnp.einsum("bk,kocs->bocs", att, weight)          # f32 aggregation
    w_agg = w_agg.astype(jnp.bfloat16).astype(jnp.float32)    # bf16 operand
    x_r = x.astype(jnp.bfloat16).astype(jnp.float32)          # bf16 operand
    b_agg = att @ bias
    pad = int((ksz - 1) / 2 * dilation)
    outs = []
    for b in range(B):
        o = jax.lax.conv_general_dilated(
            x_r[b][None], w_agg[b], window_strides=(1,), padding=[(pad, pad)],
            rhs_dilation=(dilation,), dimension_numbers=("NCH", "OIH", "NCH"),
            precision=jax.lax.Precision.HIGHEST)
        outs.append(o[0] + b_agg[b][:, None])
    return jnp.stack(outs, 0)


if __name__ == "__main__":
    key = jax.random.PRNGKey(0)
    kp, kr, kx, kb = jax.random.split(key, 4)

    B, ref_dim, Cin, Cout, L = 2, 6, 4, 8, 16
    dilate_rate = [1, 2, 3]
    K = 4
    kernel_size = 3

    model = ASPPDynamicConv1dReferPallas(
        kp, reference_dim=ref_dim, dilate_rate=dilate_rate, K=K,
        kernel_size=kernel_size, in_planes=Cin, out_planes=Cout)

    # The module initializes biases to zero; randomize them here so the bias
    # path of the kernel is actually exercised by the check.
    for br in model.branches:
        kb, kk = jax.random.split(kb)
        br["bias"] = 0.1 * jax.random.normal(kk, br["bias"].shape, jnp.float32)

    reference = jax.random.normal(kr, (B, ref_dim), jnp.float32)
    x = jax.random.normal(kx, (B, Cin, L), jnp.float32)

    out = jax.block_until_ready(model(reference, x))
    assert out.shape == (B, Cout * len(dilate_rate), L), out.shape

    # correctness check against a pure-JAX reference
    ref_outs = []
    for br in model.branches:
        att = attention1d_forward(
            reference[:, :, None], br["fc1_w"], br["fc2_w"], br["fc2_b"],
            model.temperature)
        ref_outs.append(
            _reference_branch(att, br["weight"], br["bias"], x, br["dilation"]))
    ref_out = jnp.concatenate(ref_outs, axis=1)
    max_err = float(jnp.max(jnp.abs(out - ref_out)))
    assert jnp.allclose(out, ref_out, rtol=1e-2, atol=1e-2), max_err

    print("KERNEL_OK")
</pallas_src>

<mosaic_0001>
module attributes {stable_mosaic.version = 11 : i64} {
  func.func @_fused_dyn_conv1d_kernel(%arg0: i32, %arg1: i32, %arg2: i32, %arg3: memref<24xf32, #tpu.memory_space<smem>>, %arg4: memref<1x4x8x12xf32, #tpu.memory_space<vmem>>, %arg5: memref<1x1x8x1xf32, #tpu.memory_space<vmem>>, %arg6: memref<1x1x12x16xbf16, #tpu.memory_space<vmem>>, %arg7: memref<1x8x16xf32, #tpu.memory_space<vmem>>) attributes {dimension_semantics = [#tpu.dimension_semantics<parallel>, #tpu.dimension_semantics<parallel>, #tpu.dimension_semantics<parallel>], iteration_bounds = array<i64: 3, 2, 1>, scalar_prefetch = 0 : i64, scratch_operands = 0 : i64, tpu.core_type = #tpu.core_type<tc>, window_params = [{transform_indices = @transform_0, window_bounds = array<i64: 24>}, {transform_indices = @transform_1, window_bounds = array<i64: 1, 4, 8, 12>}, {transform_indices = @transform_2, window_bounds = array<i64: 1, 1, 8, 1>}, {transform_indices = @transform_3, window_bounds = array<i64: 1, 1, 12, 16>}, {transform_indices = @transform_4, window_bounds = array<i64: 1, 8, 16>}]} {
    %c2_i32 = arith.constant 2 : i32
    %0 = arith.muli %arg0, %c2_i32 : i32
    %1 = arith.addi %0, %arg1 : i32
    %c4_i32 = arith.constant 4 : i32
    %2 = arith.muli %1, %c4_i32 : i32
    %3 = arith.index_cast %2 : i32 to index
    %4 = memref.load %arg3[%3] : memref<24xf32, #tpu.memory_space<smem>>
    %c0 = arith.constant 0 : index
    %c0_0 = arith.constant 0 : index
    %c0_1 = arith.constant 0 : index
    %c0_2 = arith.constant 0 : index
    %5 = vector.load %arg4[%c0, %c0_0, %c0_1, %c0_2] : memref<1x4x8x12xf32, #tpu.memory_space<vmem>>, vector<1x1x8x12xf32>
    %6 = vector.shape_cast %5 : vector<1x1x8x12xf32> to vector<8x12xf32>
    %7 = vector.broadcast %4 : f32 to vector<8x12xf32>
    %8 = arith.mulf %7, %6 : vector<8x12xf32>
    %c1_i32 = arith.constant 1 : i32
    %9 = arith.addi %2, %c1_i32 : i32
    %10 = arith.index_cast %9 : i32 to index
    %11 = memref.load %arg3[%10] : memref<24xf32, #tpu.memory_space<smem>>
    %c0_3 = arith.constant 0 : index
    %c1 = arith.constant 1 : index
    %c0_4 = arith.constant 0 : index
    %c0_5 = arith.constant 0 : index
    %12 = vector.load %arg4[%c0_3, %c1, %c0_4, %c0_5] : memref<1x4x8x12xf32, #tpu.memory_space<vmem>>, vector<1x1x8x12xf32>
    %13 = vector.shape_cast %12 : vector<1x1x8x12xf32> to vector<8x12xf32>
    %14 = vector.broadcast %11 : f32 to vector<8x12xf32>
    %15 = arith.mulf %14, %13 : vector<8x12xf32>
    %16 = arith.addf %8, %15 : vector<8x12xf32>
    %c2_i32_6 = arith.constant 2 : i32
    %17 = arith.addi %2, %c2_i32_6 : i32
    %18 = arith.index_cast %17 : i32 to index
    %19 = memref.load %arg3[%18] : memref<24xf32, #tpu.memory_space<smem>>
    %c0_7 = arith.constant 0 : index
    %c2 = arith.constant 2 : index
    %c0_8 = arith.constant 0 : index
    %c0_9 = arith.constant 0 : index
    %20 = vector.load %arg4[%c0_7, %c2, %c0_8, %c0_9] : memref<1x4x8x12xf32, #tpu.memory_space<vmem>>, vector<1x1x8x12xf32>
    %21 = vector.shape_cast %20 : vector<1x1x8x12xf32> to vector<8x12xf32>
    %22 = vector.broadcast %19 : f32 to vector<8x12xf32>
    %23 = arith.mulf %22, %21 : vector<8x12xf32>
    %24 = arith.addf %16, %23 : vector<8x12xf32>
    %c3_i32 = arith.constant 3 : i32
    %25 = arith.addi %2, %c3_i32 : i32
    %26 = arith.index_cast %25 : i32 to index
    %27 = memref.load %arg3[%26] : memref<24xf32, #tpu.memory_space<smem>>
    %c0_10 = arith.constant 0 : index
    %c3 = arith.constant 3 : index
    %c0_11 = arith.constant 0 : index
    %c0_12 = arith.constant 0 : index
    %28 = vector.load %arg4[%c0_10, %c3, %c0_11, %c0_12] : memref<1x4x8x12xf32, #tpu.memory_space<vmem>>, vector<1x1x8x12xf32>
    %29 = vector.shape_cast %28 : vector<1x1x8x12xf32> to vector<8x12xf32>
    %30 = vector.broadcast %27 : f32 to vector<8x12xf32>
    %31 = arith.mulf %30, %29 : vector<8x12xf32>
    %32 = arith.addf %24, %31 : vector<8x12xf32>
    %33 = arith.truncf %32 : vector<8x12xf32> to vector<8x12xbf16>
    %c0_13 = arith.constant 0 : index
    %c0_14 = arith.constant 0 : index
    %c0_15 = arith.constant 0 : index
    %c0_16 = arith.constant 0 : index
    %34 = vector.load %arg6[%c0_13, %c0_14, %c0_15, %c0_16] : memref<1x1x12x16xbf16, #tpu.memory_space<vmem>>, vector<1x1x12x16xbf16>
    %35 = vector.shape_cast %34 : vector<1x1x12x16xbf16> to vector<12x16xbf16>
    %cst = arith.constant dense<0.000000e+00> : vector<8x16xf32>
    %36 = tpu.matmul %33, %35, %cst {dimension_numbers = #tpu.dot_dimension_numbers<[1], [0], [0], [1], [0, 0, 1, 1], [], []>} : vector<8x12xbf16>, vector<12x16xbf16>, vector<8x16xf32> -> vector<8x16xf32>
    %c0_17 = arith.constant 0 : index
    %c0_18 = arith.constant 0 : index
    %c0_19 = arith.constant 0 : index
    %c0_20 = arith.constant 0 : index
    %37 = vector.load %arg5[%c0_17, %c0_18, %c0_19, %c0_20] : memref<1x1x8x1xf32, #tpu.memory_space<vmem>>, vector<1x1x8x1xf32>
    %38 = vector.shape_cast %37 : vector<1x1x8x1xf32> to vector<8x1xf32>
    %39 = vector.broadcast %38 : vector<8x1xf32> to vector<8x16xf32>
    %40 = arith.addf %36, %39 : vector<8x16xf32>
    %c0_21 = arith.constant 0 : index
    %c0_22 = arith.constant 0 : index
    %c0_23 = arith.constant 0 : index
    %41 = vector.load %arg7[%c0_21, %c0_22, %c0_23] : memref<1x8x16xf32, #tpu.memory_space<vmem>>, vector<1x8x16xf32>
    %42 = vector.shape_cast %41 : vector<1x8x16xf32> to vector<8x16xf32>
    %43 = vector.shape_cast %40 : vector<8x16xf32> to vector<1x8x16xf32>
    tpu.vector_store %arg7[%c0_21, %c0_22, %c0_23], %43 {strides = array<i32>} : memref<1x8x16xf32, #tpu.memory_space<vmem>>, vector<1x8x16xf32>,
    return
  }
  func.func @transform_0(%arg0: i32, %arg1: i32, %arg2: i32) -> i32 {
    %c0_i32 = arith.constant 0 : i32
    %c0_i32_0 = arith.constant 0 : i32
    return %c0_i32 : i32
  }
  func.func @transform_1(%arg0: i32, %arg1: i32, %arg2: i32) -> (i32, i32, i32, i32) {
    %c0_i32 = arith.constant 0 : i32
    %c0_i32_0 = arith.constant 0 : i32
    %c0_i32_1 = arith.constant 0 : i32
    %c0_i32_2 = arith.constant 0 : i32
    return %arg0, %c0_i32, %c0_i32_0, %c0_i32_1 : i32, i32, i32, i32
  }
  func.func @transform_2(%arg0: i32, %arg1: i32, %arg2: i32) -> (i32, i32, i32, i32) {
    %c0_i32 = arith.constant 0 : i32
    %c0_i32_0 = arith.constant 0 : i32
    %c0_i32_1 = arith.constant 0 : i32
    return %arg0, %arg1, %c0_i32, %c0_i32_0 : i32, i32, i32, i32
  }
  func.func @transform_3(%arg0: i32, %arg1: i32, %arg2: i32) -> (i32, i32, i32, i32) {
    %c0_i32 = arith.constant 0 : i32
    %c0_i32_0 = arith.constant 0 : i32
    return %arg0, %arg1, %c0_i32, %arg2 : i32, i32, i32, i32
  }
  func.func @transform_4(%arg0: i32, %arg1: i32, %arg2: i32) -> (i32, i32, i32) {
    %c0_i32 = arith.constant 0 : i32
    return %arg1, %arg0, %arg2 : i32, i32, i32
  }
}

</mosaic_0001>

<llo_original>
// kernel: tpu_custom_call.1
$region0: #{tpu_custom_call.1}
  #allocation0 [shape = 'u32[]', space=smem, size = 0x4, offset = 0x4, fixed_abs, tag = 'smem constant byte address 0x4 - core index']
  #allocation1 [shape = 'u32[144,128]{1,0:T(1,128)}', space=vmem, size = 0x12000, scoped, tag = 'internal scratch']
  %s0 = inlined_call_operand.vmem [shape: f32[24], index: 0, kind: input, shape index: {}]
  %s1 = inlined_call_operand.vmem [shape: f32[3,4,8,12], index: 1, kind: input, shape index: {}]
  %s2 = inlined_call_operand.vmem [shape: f32[3,2,8,1], index: 2, kind: input, shape index: {}]
  %s3 = inlined_call_operand.vmem [shape: bf16[3,2,12,16], index: 3, kind: input, shape index: {}]
  %s4 = inlined_call_operand.vmem [shape: f32[2,24,16], index: 4, kind: output, shape index: {}]
  %s5 = sld [smem:[#allocation0]]
  $region53: #{tpu_custom_call.1} parent=0
    _
  %s7 = ssub.s32 1, %s5
  %s8 = scalar_select 0, %s7, %s5
  $region1: #{tpu_custom_call.1} parent=0
    #allocation2 [shape = 'u8[512]{0}', space=smem, size = 0x200, scoped, tag = 'input window, operand 0, single buffered']
    #allocation3 [shape = 's32[2]{0}', space=sflag, size = 0x8, scoped, tag = 'scoped memory for tpu_custom_call.1']
    %9 = vsyncpa [#allocation3], 0
    loop: start=0, step=1, limit=8
    $region2: #{tpu_custom_call.1} parent=1 // loop_pre_header
      _
    $region3: #{tpu_custom_call.1} parent=1 // loop_header
      %s11 = sphi 0, %s15
      %p12 = scmp.ge.s32.totalorder %s11, 8
      %s18 = sphi 0, %s37
      %s19 = sphi 0, %s33
      %s20 = sphi 0, %s29
      %s21 = sphi 0, %s18
      %s22 = sphi 0, %s19
      %s23 = sphi 0, %s20
      %s24 = sphi 0, %s21
      %s25 = sphi 0, %s22
      %s26 = sphi 0, %s23
      %s38 = sphi 0, %s38
      %s40 = sphi 0, %s38
      %s41 = sphi 0, %s40
      %s55 = sphi 0, %s41
      %s61 = sphi 0, %s63
      %s64 = sphi 0, %s61
      %s65 = sphi 0, %s64
      %s81 = sphi 0, %s65
      %s89 = sphi 0, %s91
      %s92 = sphi 0, %s89
      %s93 = sphi 0, %s92
      %s109 = sphi 0, %s93
      %s119 = sphi 0, %s121
      %s122 = sphi 0, %s119
      %s123 = sphi 0, %s122
      %s139 = sphi 0, %s123
      %s149 = sphi 0, %s151
      %s152 = sphi 0, %s149
      %s153 = sphi 0, %s152
      %s169 = sphi 0, %s153
    $region4: #{tpu_custom_call.1} parent=1 // loop_header_branch
      %14 = sbr.rel (%p12) target = $region8
    $region5: #{tpu_custom_call.1} parent=1 // loop_body
      %s16 = ssub.s32 %s11, 1
      %s17 = ssub.s32 %s11, 2
      %s27 = sadd.s32 1, %s20
      %p28 = scmp.ge.s32.totalorder %s27, 1
      %s29 = scalar_select %p28, 0, %s27
      %s30 = sadd.s32 1, %s19
      %s31 = scalar_select %p28, %s30, %s19
      %p32 = scmp.ge.s32.totalorder %s31, 2
      %s33 = scalar_select %p32, 0, %s31
      %s34 = sadd.s32 1, %s18
      %s35 = scalar_select %p32, %s34, %s18
      %p36 = scmp.ge.s32.totalorder %s35, 3
      %s37 = scalar_select %p36, 0, %s35
      %s39 = sadd.s32 %s38, 1
      %p42 = scmp.eq.s32.totalorder %s11, 5
      %p43 = scmp.ne.s32.totalorder %s38, %s40
      %p44 = scmp.eq.s32.totalorder %s11, 0
      %p45 = por %p43, %p44
      %p46 = scmp.ne.s32.totalorder %s38, %s40
      %p47 = scmp.eq.s32.totalorder %s16, 5
      %p48 = por %p46, %p47
      %p49 = scmp.ne.s32.totalorder %s40, %s41
      %p50 = scmp.eq.s32.totalorder %s16, 0
      %p51 = por %p49, %p50
      %p52 = scmp.ne.s32.totalorder %s40, %s41
      %p53 = scmp.eq.s32.totalorder %s17, 5
      %p54 = por %p52, %p53
      %p56 = scmp.ne.s32.totalorder %s41, %s55
      %p57 = scmp.eq.s32.totalorder %s17, 0
      %p58 = por %p56, %p57
      %s59 = ssub.s32 %s18, %s37
      %p60 = scmp.eq.s32.totalorder %s59, 0
      %s62 = sadd.s32 %s61, 1
      %s63 = scalar_select %p60, %s61, %s62
      %p66 = pneg %p60
      %p67 = scmp.eq.s32.totalorder %s11, 5
      %p68 = por %p66, %p67
      %p69 = scmp.ne.s32.totalorder %s61, %s64
      %p70 = scmp.eq.s32.totalorder %s11, 0
      %p71 = por %p69, %p70
      %p72 = scmp.ne.s32.totalorder %s61, %s64
      %p73 = scmp.eq.s32.totalorder %s16, 5
      %p74 = por %p72, %p73
      %p75 = scmp.ne.s32.totalorder %s64, %s65
      %p76 = scmp.eq.s32.totalorder %s16, 0
      %p77 = por %p75, %p76
      %p78 = scmp.ne.s32.totalorder %s64, %s65
      %p79 = scmp.eq.s32.totalorder %s17, 5
      %p80 = por %p78, %p79
      %p82 = scmp.ne.s32.totalorder %s65, %s81
      %p83 = scmp.eq.s32.totalorder %s17, 0
      %p84 = por %p82, %p83
      %s85 = ssub.s32 %s18, %s37
      %s86 = ssub.s32 %s19, %s33
      %s87 = sor.u32 %s85, %s86
      %p88 = scmp.eq.s32.totalorder %s87, 0
      %s90 = sadd.s32 %s89, 1
      %s91 = scalar_select %p88, %s89, %s90
      %p94 = pneg %p88
      %p95 = scmp.eq.s32.totalorder %s11, 5
      %p96 = por %p94, %p95
      %p97 = scmp.ne.s32.totalorder %s89, %s92
      %p98 = scmp.eq.s32.totalorder %s11, 0
      %p99 = por %p97, %p98
      %p100 = scmp.ne.s32.totalorder %s89, %s92
      %p101 = scmp.eq.s32.totalorder %s16, 5
      %p102 = por %p100, %p101
      %p103 = scmp.ne.s32.totalorder %s92, %s93
      %p104 = scmp.eq.s32.totalorder %s16, 0
      %p105 = por %p103, %p104
      %p106 = scmp.ne.s32.totalorder %s92, %s93
      %p107 = scmp.eq.s32.totalorder %s17, 5
      %p108 = por %p106, %p107
      %p110 = scmp.ne.s32.totalorder %s93, %s109
      %p111 = scmp.eq.s32.totalorder %s17, 0
      %p112 = por %p110, %p111
      %s113 = ssub.s32 %s18, %s37
      %s114 = ssub.s32 %s19, %s33
      %s115 = sor.u32 %s113, %s114
      %s116 = ssub.s32 %s20, %s29
      %s117 = sor.u32 %s115, %s116
      %p118 = scmp.eq.s32.totalorder %s117, 0
      %s120 = sadd.s32 %s119, 1
      %s121 = scalar_select %p118, %s119, %s120
      %p124 = pneg %p118
      %p125 = scmp.eq.s32.totalorder %s11, 5
      %p126 = por %p124, %p125
      %p127 = scmp.ne.s32.totalorder %s119, %s122
      %p128 = scmp.eq.s32.totalorder %s11, 0
      %p129 = por %p127, %p128
      %p130 = scmp.ne.s32.totalorder %s119, %s122
      %p131 = scmp.eq.s32.totalorder %s16, 5
      %p132 = por %p130, %p131
      %p133 = scmp.ne.s32.totalorder %s122, %s123
      %p134 = scmp.eq.s32.totalorder %s16, 0
      %p135 = por %p133, %p134
      %p136 = scmp.ne.s32.totalorder %s122, %s123
      %p137 = scmp.eq.s32.totalorder %s17, 5
      %p138 = por %p136, %p137
      %p140 = scmp.ne.s32.totalorder %s123, %s139
      %p141 = scmp.eq.s32.totalorder %s17, 0
      %p142 = por %p140, %p141
      %s143 = ssub.s32 %s19, %s33
      %s144 = ssub.s32 %s18, %s37
      %s145 = sor.u32 %s143, %s144
      %s146 = ssub.s32 %s20, %s29
      %s147 = sor.u32 %s145, %s146
      %p148 = scmp.eq.s32.totalorder %s147, 0
      %s150 = sadd.s32 %s149, 1
      %s151 = scalar_select %p148, %s149, %s150
      %p154 = pneg %p148
      %p155 = scmp.eq.s32.totalorder %s11, 5
      %p156 = por %p154, %p155
      %p157 = scmp.ne.s32.totalorder %s149, %s152
      %p158 = scmp.eq.s32.totalorder %s11, 0
      %p159 = por %p157, %p158
      %p160 = scmp.ne.s32.totalorder %s149, %s152
      %p161 = scmp.eq.s32.totalorder %s16, 5
      %p162 = por %p160, %p161
      %p163 = scmp.ne.s32.totalorder %s152, %s153
      %p164 = scmp.eq.s32.totalorder %s16, 0
      %p165 = por %p163, %p164
      %p166 = scmp.ne.s32.totalorder %s152, %s153
      %p167 = scmp.eq.s32.totalorder %s17, 5
      %p168 = por %p166, %p167
      %p170 = scmp.ne.s32.totalorder %s153, %s169
      %p171 = scmp.eq.s32.totalorder %s17, 0
      %p172 = por %p170, %p171
      %p173 = scmp.le.s32.totalorder 1, %s11
      %p174 = scmp.lt.s32.totalorder %s11, 7
      %p175 = pnand %p173, %p174
      %p176 = pneg %p175
      // Predicated region
      $region9: #{tpu_custom_call.1} parent=5 // pred_check
        _
      $region10: #{tpu_custom_call.1} parent=5 // pred_check_branch
        %178 = sbr.rel (%p175) target = $region12
      $region11: #{tpu_custom_call.1} parent=5 // pred_region
        %s179 = ssub.s32 %s11, 1
        // Predicated region
        $region13: #{tpu_custom_call.1} parent=11 // pred_check
          %p180 = pneg %p51
        $region14: #{tpu_custom_call.1} parent=11 // pred_check_branch
          %182 = sbr.rel (%p180) target = $region16
        $region15: #{tpu_custom_call.1} parent=11 // pred_region
          %s184 = ssub.s32 16, 16
          %185 = vsyncadd [#allocation3], %s184
          %s187 = sshll.u32 %s0, 4
          %s188 = int_to_ptr.vmem [resolvable:$true] %s187
          %190 = dma.vmem_to_smem %s188, 16, [#allocation2], [#allocation3]
        $region16: #{tpu_custom_call.1} parent=11 // pred_fallthru
          _
      $region12: #{tpu_custom_call.1} parent=5 // pred_fallthru
        _
      %p191 = scmp.lt.s32.totalorder %s11, 6
      // Predicated region
      $region17: #{tpu_custom_call.1} parent=5 // pred_check
        %p192 = pneg %p191
      $region18: #{tpu_custom_call.1} parent=5 // pred_check_branch
        %194 = sbr.rel (%p192) target = $region20
      $region19: #{tpu_custom_call.1} parent=5 // pred_region
        // Predicated region
        $region21: #{tpu_custom_call.1} parent=19 // pred_check
          %p195 = pneg %p71
        $region22: #{tpu_custom_call.1} parent=19 // pred_check_branch
          %197 = sbr.rel (%p195) target = $region24
        $region23: #{tpu_custom_call.1} parent=19 // pred_region
          %p198 = scmp.lt.s32.totalorder %s18, 2
          %s199 = scalar_select %p198, %s18, 2
          %s200 = smul.addr %s199, 4
          %s201 = smul.addr %s200, 8
          %s202 = scalar_lea.vmem %s1, %s201
        $region24: #{tpu_custom_call.1} parent=19 // pred_fallthru
          _
        // Predicated region
        $region25: #{tpu_custom_call.1} parent=19 // pred_check
          %p203 = pneg %p99
        $region26: #{tpu_custom_call.1} parent=19 // pred_check_branch
          %205 = sbr.rel (%p203) target = $region28
        $region27: #{tpu_custom_call.1} parent=19 // pred_region
          %p206 = scmp.lt.s32.totalorder %s18, 2
          %s207 = scalar_select %p206, %s18, 2
          %p208 = scmp.lt.s32.totalorder %s19, 1
          %s209 = scalar_select %p208, %s19, 1
          %s210 = smul.addr %s207, 2
          %s211 = sadd.s32 %s209, %s210
          %s212 = smul.addr %s211, 8
          %s213 = scalar_lea.vmem %s2, %s212
        $region28: #{tpu_custom_call.1} parent=19 // pred_fallthru
          _
        // Predicated region
        $region29: #{tpu_custom_call.1} parent=19 // pred_check
          %p214 = pneg %p129
        $region30: #{tpu_custom_call.1} parent=19 // pred_check_branch
          %216 = sbr.rel (%p214) target = $region32
        $region31: #{tpu_custom_call.1} parent=19 // pred_region
          %p217 = scmp.lt.s32.totalorder %s18, 2
          %s218 = scalar_select %p217, %s18, 2
          %p219 = scmp.lt.s32.totalorder %s19, 1
          %s220 = scalar_select %p219, %s19, 1
          %p221 = scmp.lt.s32.totalorder %s20, 0
          %s222 = scalar_select %p221, %s20, 0
          %s223 = smul.addr %s220, 2
          %s224 = sadd.s32 %s222, %s223
          %s225 = smul.addr %s218, 4
          %s226 = sadd.s32 %s224, %s225
          %s227 = smul.addr %s226, 4
          %s228 = scalar_lea.vmem %s3, %s227
        $region32: #{tpu_custom_call.1} parent=19 // pred_fallthru
          _
      $region20: #{tpu_custom_call.1} parent=5 // pred_fallthru
        _
      %p229 = scmp.le.s32.totalorder 1, %s11
      %p230 = scmp.lt.s32.totalorder %s11, 7
      %p231 = pnand %p229, %p230
      %p232 = pneg %p231
      // Predicated region
      $region33: #{tpu_custom_call.1} parent=5 // pred_check
        _
      $region34: #{tpu_custom_call.1} parent=5 // pred_check_branch
        %234 = sbr.rel (%p231) target = $region36
      $region35: #{tpu_custom_call.1} parent=5 // pred_region
        %s235 = ssub.s32 %s11, 1
        // Predicated region
        $region37: #{tpu_custom_call.1} parent=35 // pred_check
          %p236 = pneg %p51
        $region38: #{tpu_custom_call.1} parent=35 // pred_check_branch
          %238 = sbr.rel (%p236) target = $region40
        $region39: #{tpu_custom_call.1} parent=35 // pred_region
          %239 = dma.done [#allocation3], 16
        $region40: #{tpu_custom_call.1} parent=35 // pred_fallthru
          _
        %240 = sfence
        %p241 = pneg %p51
        %p242 = pneg %p48
        %p243 = scmp.lt.s32.totalorder %s21, 2
        %s244 = scalar_select %p243, %s21, 2
        %s245 = smul.addr %s244, 4
        %s246 = smul.addr %s245, 8
        %s247 = scalar_lea.vmem %s1, %s246
        %p248 = pneg %p77
        %p249 = pneg %p74
        %p250 = scmp.lt.s32.totalorder %s21, 2
        %s251 = scalar_select %p250, %s21, 2
        %p252 = scmp.lt.s32.totalorder %s22, 1
        %s253 = scalar_select %p252, %s22, 1
        %s254 = smul.addr %s251, 2
        %s255 = sadd.s32 %s253, %s254
        %s256 = smul.addr %s255, 8
        %s257 = scalar_lea.vmem %s2, %s256
        %p258 = pneg %p105
        %p259 = pneg %p102
        %p260 = scmp.lt.s32.totalorder %s21, 2
        %s261 = scalar_select %p260, %s21, 2
        %p262 = scmp.lt.s32.totalorder %s22, 1
        %s263 = scalar_select %p262, %s22, 1
        %p264 = scmp.lt.s32.totalorder %s23, 0
        %s265 = scalar_select %p264, %s23, 0
        %s266 = smul.addr %s263, 2
        %s267 = sadd.s32 %s265, %s266
        %s268 = smul.addr %s261, 4
        %s269 = sadd.s32 %s267, %s268
        %s270 = smul.addr %s269, 4
        %s271 = scalar_lea.vmem %s3, %s270
        %p272 = pneg %p135
        %p273 = pneg %p132
        %p274 = pneg %p165
        %p275 = pneg %p162
        %p276 = scmp.lt.s32.totalorder %s22, 1
        %s277 = scalar_select %p276, %s22, 1
        %p278 = scmp.lt.s32.totalorder %s21, 2
        %s279 = scalar_select %p278, %s21, 2
        %p280 = scmp.lt.s32.totalorder %s23, 0
        %s281 = scalar_select %p280, %s23, 0
        %s282 = sadd.s32 %s281, %s279
        %s283 = smul.addr %s277, 3
        %s284 = sadd.s32 %s282, %s283
        %s285 = smul.addr %s284, 8
        %s286 = scalar_lea.vmem %s4, %s285
        %p287 = scmp.lt.s32.totalorder %s21, 2
        %s288 = scalar_select %p287, %s21, 2
        %s289 = smul.addr %s288, 4
        %s290 = smul.addr %s289, 8
        %s291 = scalar_lea.vmem %s1, %s290
        %p292 = scmp.lt.s32.totalorder %s21, 2
        %s293 = scalar_select %p292, %s21, 2
        %p294 = scmp.lt.s32.totalorder %s22, 1
        %s295 = scalar_select %p294, %s22, 1
        %s296 = smul.addr %s293, 2
        %s297 = sadd.s32 %s295, %s296
        %s298 = smul.addr %s297, 8
        %s299 = scalar_lea.vmem %s2, %s298
        %p300 = scmp.lt.s32.totalorder %s21, 2
        %s301 = scalar_select %p300, %s21, 2
        %p302 = scmp.lt.s32.totalorder %s22, 1
        %s303 = scalar_select %p302, %s22, 1
        %p304 = scmp.lt.s32.totalorder %s23, 0
        %s305 = scalar_select %p304, %s23, 0
        %s306 = smul.addr %s303, 2
        %s307 = sadd.s32 %s305, %s306
        %s308 = smul.addr %s301, 4
        %s309 = sadd.s32 %s307, %s308
        %s310 = smul.addr %s309, 4
        %s311 = scalar_lea.vmem %s3, %s310
        %p312 = scmp.lt.s32.totalorder %s22, 1
        %s313 = scalar_select %p312, %s22, 1
        %p314 = scmp.lt.s32.totalorder %s21, 2
        %s315 = scalar_select %p314, %s21, 2
        %p316 = scmp.lt.s32.totalorder %s23, 0
        %s317 = scalar_select %p316, %s23, 0
        %s318 = sadd.s32 %s317, %s315
        %s319 = smul.addr %s313, 3
        %s320 = sadd.s32 %s318, %s319
        %s321 = smul.addr %s320, 8
        %s322 = scalar_lea.vmem %s4, %s321
        %s324 = smul.u32 %s21, 2
        %s325 = sadd.s32 %s324, %s22
        %s326 = smul.u32 %s325, 4
        %s327 = sld [smem:[#allocation2 + %s326]]
        %v328 = vld [vmem:[%s291] sm:$0xff]
        %v329 = vstv %s327
        %v330 = vmul.f32 %v329, %v328
        %s331 = sadd.s32 %s326, 1
        %s332 = sld [smem:[#allocation2 + %s331]]
        %s333 = scalar_lea.vmem %s291, 8
        %v334 = vld [vmem:[%s333] sm:$0xff]
        %v335 = vstv %s332
        %v336 = vmul.f32 %v335, %v334
        %v337 = vadd.f32 %v330, %v336
        %s338 = sadd.s32 %s326, 2
        %s339 = sld [smem:[#allocation2 + %s338]]
        %s340 = scalar_lea.vmem %s291, 16
        %v341 = vld [vmem:[%s340] sm:$0xff]
        %v342 = vstv %s339
        %v343 = vmul.f32 %v342, %v341
        %v344 = vadd.f32 %v337, %v343
        %s345 = sadd.s32 %s326, 3
        %s346 = sld [smem:[#allocation2 + %s345]]
        %s347 = scalar_lea.vmem %s291, 24
        %v348 = vld [vmem:[%s347] sm:$0xff]
        %v349 = vstv %s346
        %v350 = vmul.f32 %v349, %v348
        %v351 = vadd.f32 %v344, %v350
        %v352 = vpack.c.bf16 %v351, %v351
        %v353 = vld [vmem:[%s311] sm:$0xf]
        %v354 = vld [vmem:[%s311 + $0x4] sm:$0x3]
        %v355 = vld [vmem:[%s299] sm:$0xff]
        %357 = vset.pattern.permute.xlu0 0
        %358 = vperm.xlu0 %357, %v355
        %v359 = vpop.permute.xlu0 %358
        %v363 = vunpack.c.l.b16 %v353
        %v364 = vunpack.c.l.b16 %v354
        %v365 = vpack.c.b16 %v364, %v363
        %vm366 = vcmask 97280
        %v368 = vsel %vm366, %v352, 0
        %vm370 = vcmask 1045504
        %v372 = vsel %vm370, %v365, 0
        %374 = vmatprep.subr.bf16.mxu0 0
        %375 = vmatpush1.bf16.msra.mxu0 %v372
        %376 = vmatprep.subr.bf16.mxu0 0
        %377 = vmatpush1.bf16.msra.mxu0 0
        %378 = vmatprep.subr.bf16.mxu0 0
        %379 = vmatpush1.bf16.msra.mxu0 0
        %380 = vmatprep.subr.bf16.mxu0 0
        %381 = vmatpush1.bf16.msra.mxu0 0
        %382 = vmatprep.subr.bf16.mxu0 0
        %383 = vmatpush1.bf16.msra.mxu0 0
        %384 = vmatprep.subr.bf16.mxu0 0
        %385 = vmatpush1.bf16.msra.mxu0 0
        %386 = vmatprep.subr.bf16.mxu0 0
        %387 = vmatpush1.bf16.msra.mxu0 0
        %388 = vmatprep.subr.bf16.mxu0 0
        %389 = vmatpush1.bf16.msra.mxu0 0
        %390 = vmatprep.subr.bf16.mxu0 0
        %391 = vmatpush1.bf16.msra.mxu0 0
        %392 = vmatprep.subr.bf16.mxu0 0
        %393 = vmatpush1.bf16.msra.mxu0 0
        %394 = vmatprep.subr.bf16.mxu0 0
        %395 = vmatpush1.bf16.msra.mxu0 0
        %396 = vmatprep.subr.bf16.mxu0 0
        %397 = vmatpush1.bf16.msra.mxu0 0
        %398 = vmatprep.subr.bf16.mxu0 0
        %399 = vmatpush1.bf16.msra.mxu0 0
        %400 = vmatprep.subr.bf16.mxu0 0
        %401 = vmatpush1.bf16.msra.mxu0 0
        %402 = vmatprep.subr.bf16.mxu0 0
        %403 = vmatpush1.bf16.msra.mxu0 0
        %404 = vmatprep.subr.bf16.mxu0 0
        %405 = vmatpush1.bf16.msra.mxu0 0
        %406 = vmatprep.mubr.bf16.mxu0 0
        %407 = vmatmul.mubr.bf16.gmra.mrb[0].mxu0 %v368
        %v408 = vpop.f32.mrb[0].mxu0
        %v409 = vadd.f32 %v359, %v408
        %v410 = vpop.f32.mrb[0].mxu0
        %v411 = vpop.f32.mrb[0].mxu0
        %v412 = vpop.f32.mrb[0].mxu0
        %413 = vdwg.mxu0
        %vm414 = vcmask 130048
        %415 = vst.msk [vmem:[%s322] sm:$0xff] %vm414, %v409
        %p416 = scmp.lt.s32.totalorder %s22, 1
        %s417 = scalar_select %p416, %s22, 1
        %p418 = scmp.lt.s32.totalorder %s21, 2
        %s419 = scalar_select %p418, %s21, 2
        %p420 = scmp.lt.s32.totalorder %s23, 0
        %s421 = scalar_select %p420, %s23, 0
        %s422 = sadd.s32 %s421, %s419
        %s423 = smul.addr %s417, 3
        %s424 = sadd.s32 %s422, %s423
        %s425 = smul.addr %s424, 8
        %s426 = scalar_lea.vmem %s4, %s425
        // Predicated region
        $region41: #{tpu_custom_call.1} parent=35 // pred_check
          %p427 = pneg %p162
        $region42: #{tpu_custom_call.1} parent=35 // pred_check_branch
          %429 = sbr.rel (%p427) target = $region44
        $region43: #{tpu_custom_call.1} parent=35 // pred_region
          _
        $region44: #{tpu_custom_call.1} parent=35 // pred_fallthru
          _
      $region36: #{tpu_custom_call.1} parent=5 // pred_fallthru
        _
      %p430 = scmp.le.s32.totalorder 2, %s11
      // Predicated region
      $region45: #{tpu_custom_call.1} parent=5 // pred_check
        %p431 = pneg %p430
      $region46: #{tpu_custom_call.1} parent=5 // pred_check_branch
        %433 = sbr.rel (%p431) target = $region48
      $region47: #{tpu_custom_call.1} parent=5 // pred_region
        %s434 = ssub.s32 %s11, 2
        // Predicated region
        $region49: #{tpu_custom_call.1} parent=47 // pred_check
          %p435 = pneg %p168
        $region50: #{tpu_custom_call.1} parent=47 // pred_check_branch
          %437 = sbr.rel (%p435) target = $region52
        $region51: #{tpu_custom_call.1} parent=47 // pred_region
          %p438 = scmp.lt.s32.totalorder %s25, 1
          %s439 = scalar_select %p438, %s25, 1
          %p440 = scmp.lt.s32.totalorder %s24, 2
          %s441 = scalar_select %p440, %s24, 2
          %p442 = scmp.lt.s32.totalorder %s26, 0
          %s443 = scalar_select %p442, %s26, 0
          %s444 = sadd.s32 %s443, %s441
          %s445 = smul.addr %s439, 3
          %s446 = sadd.s32 %s444, %s445
          %s447 = smul.addr %s446, 8
          %s448 = scalar_lea.vmem %s4, %s447
        $region52: #{tpu_custom_call.1} parent=47 // pred_fallthru
          _
      $region48: #{tpu_custom_call.1} parent=5 // pred_fallthru
        _
    $region6: #{tpu_custom_call.1} parent=1 // loop_footer
      %s15 = sadd.s32 1, %s11
    $region7: #{tpu_custom_call.1} parent=1 // loop_footer_branch
      %10 = sbr.rel target = $region3
    $region8: #{tpu_custom_call.1} parent=1 // loop_exit
      _
    %449 = vsyncpa [#allocation3], 1
    %s450 = scalar_lea.sflag [#allocation3], 1
    %451 = vsyncpa %s450, 1

</llo_original>
